<compile_context>
chip_gen: v6e
topology: v6e:2x2x1
jax: 0.10.0
libtpu: 0.0.40
codegen_flags: <defaults>
</compile_context>

<pallas_src>
import functools

import jax
import jax.numpy as jnp
from jax.experimental import pallas as pl
from jax.experimental.pallas import tpu as pltpu


def _round_up(x, m):
    return ((x + m - 1) // m) * m


def _choose_tile_n(n, c, itemsize):
    # Target ~4 MiB per (TILE_N, C) logits tile so 2 inputs x 2 pipeline buffers
    # stay well under the scoped VMEM limit on all generations (v7x: 64 MiB/TC).
    target_bytes = 4 << 20
    tile = max(8, target_bytes // max(1, c * itemsize))
    tile = min(tile, 512)
    tile = _round_up(min(tile, n), 8)
    return int(tile)


def _row_loss(x, t, epsilon):
    """Per-row label-smoothed CE. x: (T, C) f32, t: (T, 1) int32 -> (T, 1) f32."""
    n, c = x.shape
    m = jnp.max(x, axis=1, keepdims=True)                              # (T, 1)
    lse = m + jnp.log(jnp.sum(jnp.exp(x - m), axis=1, keepdims=True))  # (T, 1)
    col = jax.lax.broadcasted_iota(jnp.int32, (n, c), 1)               # (T, C)
    target_logit = jnp.sum(jnp.where(col == t, x, 0.0), axis=1, keepdims=True)
    sum_x = jnp.sum(x, axis=1, keepdims=True)
    # -(1-eps)*logp[t] - (eps/C)*sum_c logp[c]
    return (1.0 - epsilon) * (lse - target_logit) + (epsilon / c) * (c * lse - sum_x)


def _ce_ls_mean_kernel(logits_ref, targets_ref, loss_ref, *, epsilon, n_total, tile_n):
    # logits_ref: (tile_n, C) native dtype, targets_ref: (tile_n, 1) int32,
    # loss_ref: (1, 1) f32 resident accumulator (same output block every step).
    i = pl.program_id(0)

    @pl.when(i == 0)
    def _init():
        loss_ref[...] = jnp.zeros_like(loss_ref)

    x = logits_ref[...].astype(jnp.float32)
    t = targets_ref[...]
    row_loss = _row_loss(x, t, epsilon)                                # (tile_n, 1)

    # Mask rows past the true batch size (padding added in the wrapper).
    row = jax.lax.broadcasted_iota(jnp.int32, (tile_n, 1), 0) + i * tile_n
    valid = (row < n_total).astype(jnp.float32)
    loss_ref[...] += jnp.sum(row_loss * valid, axis=0, keepdims=True)  # (1, 1)

    @pl.when(i == pl.num_programs(0) - 1)
    def _finalize():
        loss_ref[...] = loss_ref[...] / jnp.float32(n_total)


def _ce_ls_persample_kernel(logits_ref, targets_ref, loss_ref, *, epsilon):
    x = logits_ref[...].astype(jnp.float32)
    t = targets_ref[...]
    loss_ref[...] = _row_loss(x, t, epsilon)


def cross_entropy_label_smooth(logits, targets, *, num_classes, epsilon=0.1,
                               size_average=True):
    """JAX/Pallas equivalent of CrossEntropyLabelSmooth.forward.

    logits: (N, C) float array (kept in native dtype on the HBM side),
    targets: (N,) integer labels.
    Returns a scalar (size_average=True) or (N,) per-sample losses.
    """
    n, c = logits.shape
    assert c == num_classes
    targets2d = targets.astype(jnp.int32).reshape(n, 1)

    tile_n = _choose_tile_n(n, c, logits.dtype.itemsize)
    pad_n = _round_up(n, tile_n)
    if pad_n != n:
        logits = jnp.pad(logits, ((0, pad_n - n), (0, 0)))
        targets2d = jnp.pad(targets2d, ((0, pad_n - n), (0, 0)))
    grid = (pad_n // tile_n,)

    in_specs = [
        pl.BlockSpec((tile_n, c), lambda i: (i, 0)),   # logits, native dtype
        pl.BlockSpec((tile_n, 1), lambda i: (i, 0)),   # targets, int32
    ]

    if size_average:
        kernel = functools.partial(
            _ce_ls_mean_kernel, epsilon=float(epsilon), n_total=n, tile_n=tile_n)
        out = pl.pallas_call(
            kernel,
            out_shape=jax.ShapeDtypeStruct((1, 1), jnp.float32),
            grid=grid,
            in_specs=in_specs,
            out_specs=pl.BlockSpec((1, 1), lambda i: (0, 0)),   # resident accumulator
            compiler_params=pltpu.CompilerParams(
                dimension_semantics=("arbitrary",),
                vmem_limit_bytes=48 << 20),
        )(logits, targets2d)
        return out[0, 0]
    else:
        kernel = functools.partial(_ce_ls_persample_kernel, epsilon=float(epsilon))
        out = pl.pallas_call(
            kernel,
            out_shape=jax.ShapeDtypeStruct((pad_n, 1), jnp.float32),
            grid=grid,
            in_specs=in_specs,
            out_specs=pl.BlockSpec((tile_n, 1), lambda i: (i, 0)),
            compiler_params=pltpu.CompilerParams(
                dimension_semantics=("parallel",),
                vmem_limit_bytes=48 << 20),
        )(logits, targets2d)
        return out[:n, 0]


def _reference(logits, targets, *, num_classes, epsilon=0.1, size_average=True):
    log_probs = jax.nn.log_softmax(logits.astype(jnp.float32), axis=1)
    one_hot = jax.nn.one_hot(targets, num_classes, dtype=jnp.float32)
    smooth = (1.0 - epsilon) * one_hot + epsilon / num_classes
    if size_average:
        return (-smooth * log_probs).mean(0).sum()
    return (-smooth * log_probs).sum(1)


if __name__ == "__main__":
    key = jax.random.PRNGKey(0)
    k1, k2 = jax.random.split(key)

    num_classes = 32
    for batch in (8, 10):   # batch=10 exercises the padded / masked tail path
        logits = jax.random.normal(k1, (batch, num_classes), dtype=jnp.float32)
        targets = jax.random.randint(k2, (batch,), 0, num_classes, dtype=jnp.int32)

        # size_average=True (module default) -> scalar loss
        loss = cross_entropy_label_smooth(
            logits, targets, num_classes=num_classes, epsilon=0.1, size_average=True)
        loss = jax.block_until_ready(loss)
        ref = _reference(logits, targets, num_classes=num_classes,
                         epsilon=0.1, size_average=True)
        assert jnp.allclose(loss, ref, atol=1e-4, rtol=1e-4), (batch, loss, ref)

        # size_average=False -> per-sample loss
        loss_ps = cross_entropy_label_smooth(
            logits, targets, num_classes=num_classes, epsilon=0.1, size_average=False)
        loss_ps = jax.block_until_ready(loss_ps)
        ref_ps = _reference(logits, targets, num_classes=num_classes,
                            epsilon=0.1, size_average=False)
        assert jnp.allclose(loss_ps, ref_ps, atol=1e-4, rtol=1e-4), (batch,)

    print("KERNEL_OK")
</pallas_src>

<mosaic_0001>
module attributes {stable_mosaic.version = 11 : i64} {
  func.func @_ce_ls_mean_kernel(%arg0: i32, %arg1: memref<8x32xf32, #tpu.memory_space<vmem>>, %arg2: memref<8x1xi32, #tpu.memory_space<vmem>>, %arg3: memref<1x1xf32, #tpu.memory_space<vmem>>) attributes {dimension_semantics = [#tpu.dimension_semantics<arbitrary>], iteration_bounds = array<i64: 1>, scalar_prefetch = 0 : i64, scratch_operands = 0 : i64, tpu.core_type = #tpu.core_type<tc>, window_params = [{transform_indices = @transform_0, window_bounds = array<i64: 8, 32>}, {transform_indices = @transform_1, window_bounds = array<i64: 8, 1>}, {pipeline_mode = #tpu.pipeline_mode<synchronous>, transform_indices = @transform_2, window_bounds = array<i64: 1, 1>}]} {
    %c0_i32 = arith.constant 0 : i32
    %0 = arith.cmpi eq, %arg0, %c0_i32 : i32
    %1 = arith.extui %0 : i1 to i32
    %c0_i32_0 = arith.constant 0 : i32
    %2 = arith.cmpi ne, %1, %c0_i32_0 : i32
    scf.if %2 {
      %cst_19 = arith.constant 0.000000e+00 : f32
      %49 = vector.broadcast %cst_19 : f32 to vector<1x1xf32>
      %c0_20 = arith.constant 0 : index
      %c0_21 = arith.constant 0 : index
      %50 = vector.load %arg3[%c0_20, %c0_21] : memref<1x1xf32, #tpu.memory_space<vmem>>, vector<1x1xf32>
      tpu.vector_store %arg3[%c0_20, %c0_21], %49 {strides = array<i32>} : memref<1x1xf32, #tpu.memory_space<vmem>>, vector<1x1xf32>,
    } else {
    }
    %c0 = arith.constant 0 : index
    %c0_1 = arith.constant 0 : index
    %3 = vector.load %arg1[%c0, %c0_1] : memref<8x32xf32, #tpu.memory_space<vmem>>, vector<8x32xf32>
    %c0_2 = arith.constant 0 : index
    %c0_3 = arith.constant 0 : index
    %4 = vector.load %arg2[%c0_2, %c0_3] : memref<8x1xi32, #tpu.memory_space<vmem>>, vector<8x1xi32>
    %cst = arith.constant dense<0xFF800000> : vector<8xf32>
    %5 = vector.multi_reduction <maximumf>, %3, %cst [1] : vector<8x32xf32> to vector<8xf32>
    %6 = vector.shape_cast %5 : vector<8xf32> to vector<8x1xf32>
    %7 = vector.broadcast %6 : vector<8x1xf32> to vector<8x32xf32>
    %8 = arith.subf %3, %7 : vector<8x32xf32>
    %9 = math.exp %8 : vector<8x32xf32>
    %cst_4 = arith.constant dense<0.000000e+00> : vector<8xf32>
    %10 = vector.multi_reduction <add>, %9, %cst_4 [1] : vector<8x32xf32> to vector<8xf32>
    %11 = vector.shape_cast %10 : vector<8xf32> to vector<8x1xf32>
    %12 = math.log %11 : vector<8x1xf32>
    %13 = arith.addf %6, %12 : vector<8x1xf32>
    %14 = tpu.iota {dimensions = array<i32: 1>} : vector<8x32xi32>
    %15 = vector.broadcast %4 : vector<8x1xi32> to vector<8x32xi32>
    %16 = arith.cmpi eq, %14, %15 : vector<8x32xi32>
    %cst_5 = arith.constant 0.000000e+00 : f32
    %17 = vector.broadcast %cst_5 : f32 to vector<8x32xf32>
    %18 = arith.select %16, %3, %17 : vector<8x32xi1>, vector<8x32xf32>
    %cst_6 = arith.constant dense<0.000000e+00> : vector<8xf32>
    %19 = vector.multi_reduction <add>, %18, %cst_6 [1] : vector<8x32xf32> to vector<8xf32>
    %20 = vector.shape_cast %19 : vector<8xf32> to vector<8x1xf32>
    %cst_7 = arith.constant dense<0.000000e+00> : vector<8xf32>
    %21 = vector.multi_reduction <add>, %3, %cst_7 [1] : vector<8x32xf32> to vector<8xf32>
    %22 = vector.shape_cast %21 : vector<8xf32> to vector<8x1xf32>
    %23 = arith.subf %13, %20 : vector<8x1xf32>
    %cst_8 = arith.constant 0.899999976 : f32
    %24 = vector.broadcast %cst_8 : f32 to vector<8x1xf32>
    %25 = arith.mulf %24, %23 : vector<8x1xf32>
    %cst_9 = arith.constant 3.200000e+01 : f32
    %26 = vector.broadcast %cst_9 : f32 to vector<8x1xf32>
    %27 = arith.mulf %26, %13 : vector<8x1xf32>
    %28 = arith.subf %27, %22 : vector<8x1xf32>
    %cst_10 = arith.constant 3.125000e-03 : f32
    %29 = vector.broadcast %cst_10 : f32 to vector<8x1xf32>
    %30 = arith.mulf %29, %28 : vector<8x1xf32>
    %31 = arith.addf %25, %30 : vector<8x1xf32>
    %32 = tpu.iota {dimensions = array<i32: 0>} : vector<8x1xi32>
    %c8_i32 = arith.constant 8 : i32
    %33 = arith.muli %arg0, %c8_i32 : i32
    %34 = vector.broadcast %33 : i32 to vector<8x1xi32>
    %35 = arith.addi %32, %34 : vector<8x1xi32>
    %c8_i32_11 = arith.constant 8 : i32
    %36 = vector.broadcast %c8_i32_11 : i32 to vector<8x1xi32>
    %37 = arith.cmpi slt, %35, %36 : vector<8x1xi32>
    %38 = arith.extui %37 : vector<8x1xi1> to vector<8x1xi32>
    %39 = arith.sitofp %38 : vector<8x1xi32> to vector<8x1xf32>
    %c0_12 = arith.constant 0 : index
    %c0_13 = arith.constant 0 : index
    %40 = vector.load %arg3[%c0_12, %c0_13] : memref<1x1xf32, #tpu.memory_space<vmem>>, vector<1x1xf32>
    %41 = arith.mulf %31, %39 : vector<8x1xf32>
    %cst_14 = arith.constant dense<0.000000e+00> : vector<1xf32>
    %42 = vector.multi_reduction <add>, %41, %cst_14 [0] : vector<8x1xf32> to vector<1xf32>
    %43 = vector.shape_cast %42 : vector<1xf32> to vector<1x1xf32>
    %44 = arith.addf %40, %43 : vector<1x1xf32>
    %c0_15 = arith.constant 0 : index
    %c0_16 = arith.constant 0 : index
    %45 = vector.load %arg3[%c0_15, %c0_16] : memref<1x1xf32, #tpu.memory_space<vmem>>, vector<1x1xf32>
    tpu.vector_store %arg3[%c0_15, %c0_16], %44 {strides = array<i32>} : memref<1x1xf32, #tpu.memory_space<vmem>>, vector<1x1xf32>,
    %c0_i32_17 = arith.constant 0 : i32
    %46 = arith.cmpi eq, %arg0, %c0_i32_17 : i32
    %47 = arith.extui %46 : i1 to i32
    %c0_i32_18 = arith.constant 0 : i32
    %48 = arith.cmpi ne, %47, %c0_i32_18 : i32
    scf.if %48 {
      %c0_19 = arith.constant 0 : index
      %c0_20 = arith.constant 0 : index
      %49 = vector.load %arg3[%c0_19, %c0_20] : memref<1x1xf32, #tpu.memory_space<vmem>>, vector<1x1xf32>
      %cst_21 = arith.constant 8.000000e+00 : f32
      %50 = vector.broadcast %cst_21 : f32 to vector<1x1xf32>
      %51 = arith.divf %49, %50 : vector<1x1xf32>
      %c0_22 = arith.constant 0 : index
      %c0_23 = arith.constant 0 : index
      %52 = vector.load %arg3[%c0_22, %c0_23] : memref<1x1xf32, #tpu.memory_space<vmem>>, vector<1x1xf32>
      tpu.vector_store %arg3[%c0_22, %c0_23], %51 {strides = array<i32>} : memref<1x1xf32, #tpu.memory_space<vmem>>, vector<1x1xf32>,
    } else {
    }
    return
  }
  func.func @transform_0(%arg0: i32) -> (i32, i32) {
    %c0_i32 = arith.constant 0 : i32
    %c0_i32_0 = arith.constant 0 : i32
    return %arg0, %c0_i32 : i32, i32
  }
  func.func @transform_1(%arg0: i32) -> (i32, i32) {
    %c0_i32 = arith.constant 0 : i32
    %c0_i32_0 = arith.constant 0 : i32
    return %arg0, %c0_i32 : i32, i32
  }
  func.func @transform_2(%arg0: i32) -> (i32, i32) {
    %c0_i32 = arith.constant 0 : i32
    %c0_i32_0 = arith.constant 0 : i32
    %c0_i32_1 = arith.constant 0 : i32
    return %c0_i32, %c0_i32_0 : i32, i32
  }
}

</mosaic_0001>

<llo_original>
// kernel: tpu_custom_call.1
$region0: #{tpu_custom_call.1}
  #allocation0 [shape = 'u32[]', space=smem, size = 0x4, offset = 0x4, fixed_abs, tag = 'smem constant byte address 0x4 - core index']
  #allocation1 [shape = 'u32[144,128]{1,0:T(1,128)}', space=vmem, size = 0x12000, scoped, tag = 'internal scratch']
  %s0 = inlined_call_operand.vmem [shape: f32[8,32], index: 0, kind: input, shape index: {}]
  %s1 = inlined_call_operand.vmem [shape: s32[8,1], index: 1, kind: input, shape index: {}]
  %s2 = inlined_call_operand.hbm [shape: f32[1,1], index: 2, kind: output, shape index: {}]
  %s3 = sld [smem:[#allocation0]]
  $region26: #{tpu_custom_call.1} parent=0
    _
  %s5 = ssub.s32 1, %s3
  %s6 = scalar_select 0, %s5, %s3
  $region1: #{tpu_custom_call.1} parent=0
    #allocation2 [shape = 'u8[512]{0}', space=vmem, size = 0x400, scoped, tag = 'output window, operand 0, single buffered']
    #allocation3 [shape = 's32[1]{0}', space=sflag, size = 0x4, scoped, tag = 'scoped memory for tpu_custom_call.1']
    %7 = vsyncpa [#allocation3], 0
    // Predicated region
    $region2: #{tpu_custom_call.1} parent=1 // pred_check
      _
    $region3: #{tpu_custom_call.1} parent=1 // pred_check_branch
      %9 = sbr.rel (0) target = $region5
    $region4: #{tpu_custom_call.1} parent=1 // pred_region
      _
    $region5: #{tpu_custom_call.1} parent=1 // pred_fallthru
      _
    // Predicated region
    $region6: #{tpu_custom_call.1} parent=1 // pred_check
      _
    $region7: #{tpu_custom_call.1} parent=1 // pred_check_branch
      %11 = sbr.rel (0) target = $region9
    $region8: #{tpu_custom_call.1} parent=1 // pred_region
      _
    $region9: #{tpu_custom_call.1} parent=1 // pred_fallthru
      _
    %p12 = scmp.eq.s32.totalorder 0, 0
    // Predicated region
    $region10: #{tpu_custom_call.1} parent=1 // pred_check
      %p13 = pneg %p12
    $region11: #{tpu_custom_call.1} parent=1 // pred_check_branch
      %15 = sbr.rel (%p13) target = $region13
    $region12: #{tpu_custom_call.1} parent=1 // pred_region
      %vm16 = vcmask 0
      %17 = vst.msk [vmem:[#allocation2] sm:$0x1] %vm16, 0.0
    $region13: #{tpu_custom_call.1} parent=1 // pred_fallthru
      _
    %v18 = vld [vmem:[%s0] sm:$0xff]
    %v19 = vld [vmem:[%s1] sm:$0xff]
    %vm20 = vcmask 261120
    %v21 = vsel %vm20, %v18, -inf
    %22 = vmax.xlane.f32.xlu0 %v21
    %v23 = vpop.xlane.xlu0 %22
    %v24 = vsub.f32 %v18, %v23
    %v25 = vmul.f32 %v24, 1.442695
    %v26 = vpow.pop %v25
    %v27 = vsel %vm20, %v26, 0.0
    %28 = vadd.xlane.f32.xlu0 %v27
    %v29 = vpop.xlane.xlu0 %28
    %v30 = vlog2.pop %v29
    %v31 = vmul.f32 %v30, 0.6931472
    %v32 = vadd.f32 %v23, %v31
    %v33 = vlaneseq
    %v34 = vand.u32 %v33, 127
    %35 = vset.pattern.permute.xlu0 0
    %36 = vperm.xlu0 %35, %v19
    %v37 = vpop.permute.xlu0 %36
    %vm38 = vcmp.eq.s32.totalorder %v34, %v37
    %v39 = vsel %vm38, %v18, 0.0
    %v40 = vsel %vm20, %v39, 0.0
    %41 = vadd.xlane.f32.xlu0 %v40
    %v42 = vpop.xlane.xlu0 %41
    %v43 = vsel %vm20, %v18, 0.0
    %44 = vadd.xlane.f32.xlu0 %v43
    %v45 = vpop.xlane.xlu0 %44
    %v46 = vsub.f32 %v32, %v42
    %v47 = vmul.f32 %v46, 0.9
    %v48 = vmul.f32 %v32, 32.0
    %v49 = vsub.f32 %v48, %v45
    %v50 = vmul.f32 %v49, 0.003125
    %v51 = vadd.f32 %v47, %v50
    %v52 = vlaneseq
    %v53 = vshrl.u32 %v52, 7
    %s54 = smul.u32 0, 8
    %v55 = vstv %s54
    %v56 = vadd.s32 %v53, %v55
    %vm57 = vcmp.lt.s32.totalorder %v56, 8
    %v58 = vsel %vm57, 1, 0
    %v59 = vcvt.s32.f32 %v58
    %v60 = vld [vmem:[#allocation2] sm:$0x1]
    %v61 = vmul.f32 %v51, %v59
    %v62 = vrot.slane %v61, 4
    %v63 = vadd.f32 %v61, %v62
    %v64 = vrot.slane %v63, 2
    %v65 = vadd.f32 %v63, %v64
    %v66 = vrot.slane %v65, 1
    %v67 = vadd.f32 %v65, %v66
    %v68 = vadd.f32 %v60, %v67
    %vm69 = vcmask 0
    %70 = vst.msk [vmem:[#allocation2] sm:$0x1] %vm69, %v68
    // Predicated region
    $region14: #{tpu_custom_call.1} parent=1 // pred_check
      %p71 = pneg %p12
    $region15: #{tpu_custom_call.1} parent=1 // pred_check_branch
      %73 = sbr.rel (%p71) target = $region17
    $region16: #{tpu_custom_call.1} parent=1 // pred_region
      %v74 = vld [vmem:[#allocation2] sm:$0x1]
      %v75 = vrcp.pop 8.0
      %v76 = vmul.f32 %v74, %v75
      %77 = vst.msk [vmem:[#allocation2] sm:$0x1] %vm69, %v76
    $region17: #{tpu_custom_call.1} parent=1 // pred_fallthru
      _
    // Predicated region
    $region18: #{tpu_custom_call.1} parent=1 // pred_check
      _
    $region19: #{tpu_custom_call.1} parent=1 // pred_check_branch
      %79 = sbr.rel (0) target = $region21
    $region20: #{tpu_custom_call.1} parent=1 // pred_region
      %s81 = ssub.s32 16, 16
      %82 = vsyncadd [#allocation3], %s81
      %s84 = sshll.u32 [#allocation2], 4
      %s85 = int_to_ptr.vmem [resolvable:$true] %s84
      %87 = dma.vmem_to_hbm [thread:$0]  %s85, 16, %s2, [#allocation3]
    $region21: #{tpu_custom_call.1} parent=1 // pred_fallthru
      _
    // Predicated region
    $region22: #{tpu_custom_call.1} parent=1 // pred_check
      _
    $region23: #{tpu_custom_call.1} parent=1 // pred_check_branch
      %89 = sbr.rel (0) target = $region25
    $region24: #{tpu_custom_call.1} parent=1 // pred_region
      %90 = dma.done [#allocation3], 16
    $region25: #{tpu_custom_call.1} parent=1 // pred_fallthru
      _
    %91 = vsyncpa [#allocation3], 1

</llo_original>
